<compile_context>
chip_gen: v7x
topology: tpu7x:2x2x1
jax: 0.10.0
libtpu: 0.0.40
codegen_flags: <defaults>
</compile_context>

<pallas_src>
import jax
import jax.numpy as jnp
from jax.experimental import pallas as pl
from jax.experimental.pallas import tpu as pltpu

HIDDEN = 20      # real hidden width of the PyTorch model
LANE = 128       # TPU lane width
SUBLANE = 8      # TPU sublane granularity


def _cdiv(a, b):
    return (a + b - 1) // b


def _round_up(n, m):
    return _cdiv(n, m) * m


def mlp_kernel(x_ref, w1_ref, w23_ref, w4t_ref, b_ref, o_ref):
    """Fully fused 4-layer MLP on one batch tile.

    x_ref   : [tb, D]        f32   (rows only, no lane padding)
    w1_ref  : [D, 128]       bf16  (cols >= HIDDEN are zero)
    w23_ref : [2, 128, 128]  bf16  (W2, W3; padded rows/cols zero)
    w4t_ref : [8, 128]       bf16  (row 0 = W4 column, rest zero)
    b_ref   : [4, 128]       f32   (b1, b2, b3, b4-in-[3,0])
    o_ref   : [1, 1, tb]     f32   (lane-dense sigmoid output row)
    """
    tb = x_ref.shape[0]
    n_chunks = tb // LANE
    f32 = jnp.float32
    bf16 = jnp.bfloat16

    x = x_ref[...].astype(bf16)                                            # [tb, D]

    h = jnp.dot(x, w1_ref[...], preferred_element_type=f32) + b_ref[0:1, :]
    h = jnp.maximum(h, 0.0)                       # relu; dropout1 = identity (eval)

    h = jnp.dot(h.astype(bf16), w23_ref[0], preferred_element_type=f32) + b_ref[1:2, :]
    h = jnp.maximum(h, 0.0)                       # relu; dropout2 = identity (eval)

    h = jnp.dot(h.astype(bf16), w23_ref[1], preferred_element_type=f32) + b_ref[2:3, :]
    h = jnp.maximum(h, 0.0)                       # relu; dropout3 = identity (eval)

    # Transpose the hidden activations chunk-wise (128x128 XLU transposes) so
    # the final layer directly yields a lane-dense [1, tb] output row.
    h_t = jnp.concatenate(
        [h[c * LANE:(c + 1) * LANE, :].T for c in range(n_chunks)], axis=1)  # [128, tb]

    z = jnp.dot(w4t_ref[...], h_t.astype(bf16), preferred_element_type=f32)  # [8, tb]
    row = z[0:1, :] + b_ref[3:4, 0:1]                                         # [1, tb]
    o_ref[0] = jax.nn.sigmoid(row)


def prepare_params(params):
    """Pad + pack the model parameters once, outside the per-call hot path."""
    w1, b1, w2, b2, w3, b3, w4, b4 = params
    D = w1.shape[0]
    bf16 = jnp.bfloat16

    w1p = jnp.zeros((D, LANE), bf16).at[:, :HIDDEN].set(w1.astype(bf16))
    w2p = jnp.zeros((LANE, LANE), bf16).at[:HIDDEN, :HIDDEN].set(w2.astype(bf16))
    w3p = jnp.zeros((LANE, LANE), bf16).at[:HIDDEN, :HIDDEN].set(w3.astype(bf16))
    w23 = jnp.stack([w2p, w3p])                                    # [2, 128, 128]
    w4t = jnp.zeros((SUBLANE, LANE), bf16).at[0, :HIDDEN].set(w4[:, 0].astype(bf16))

    bias = jnp.zeros((4, LANE), jnp.float32)
    bias = bias.at[0, :HIDDEN].set(b1.reshape(-1))
    bias = bias.at[1, :HIDDEN].set(b2.reshape(-1))
    bias = bias.at[2, :HIDDEN].set(b3.reshape(-1))
    bias = bias.at[3, 0].set(b4.reshape(-1)[0])
    return (w1p, w23, w4t, bias)


def net_forward(x, prepared, *, tb=2048):
    """x: [B, D] f32 -> [B, 1] f32 (sigmoid probabilities)."""
    B, D = x.shape
    w1p, w23, w4t, bias = prepared

    # Tile selection: multiple of 128 (lane-dense output, 128-row transposes),
    # >=2 near-balanced grid steps when the batch permits (v7x has 2 TCs), and
    # sized so the tail tile carries little padding.
    tb = max(LANE, (tb // LANE) * LANE)
    num_tiles = max(1, _cdiv(B, tb))
    if num_tiles == 1 and B > LANE:
        num_tiles = 2                              # keep both v7x TensorCores busy
    tb_eff = _round_up(_cdiv(B, num_tiles), LANE)
    num_tiles = _cdiv(B, tb_eff)
    b_pad = num_tiles * tb_eff

    xp = x if b_pad == B else jnp.zeros((b_pad, D), x.dtype).at[:B, :].set(x)

    const2 = lambda i: (0, 0)                      # weights resident across grid steps
    out = pl.pallas_call(
        mlp_kernel,
        out_shape=jax.ShapeDtypeStruct((num_tiles, 1, tb_eff), jnp.float32),
        grid_spec=pltpu.PrefetchScalarGridSpec(
            num_scalar_prefetch=0,
            grid=(num_tiles,),
            in_specs=[
                pl.BlockSpec((tb_eff, D), lambda i: (i, 0)),         # x tile (rows only)
                pl.BlockSpec((D, LANE), const2),                     # W1
                pl.BlockSpec((2, LANE, LANE), lambda i: (0, 0, 0)),  # W2/W3 packed
                pl.BlockSpec((SUBLANE, LANE), const2),               # W4^T (row 0 real)
                pl.BlockSpec((4, LANE), const2),                     # packed biases
            ],
            out_specs=pl.BlockSpec((1, 1, tb_eff), lambda i: (i, 0, 0)),
        ),
        compiler_params=pltpu.CompilerParams(
            dimension_semantics=("parallel",),     # shard batch tiles across TCs (v7x)
        ),
    )(xp, w1p, w23, w4t, bias)

    # Trivial reshape: out[t, 0, j] is the prediction for batch row t*tb_eff + j.
    return out.reshape(-1, 1)[:B]


def init_params(key, input_dim):
    """Deterministic init mimicking nn.Linear's U(-1/sqrt(fan_in), 1/sqrt(fan_in))."""
    def linear(key, fan_in, fan_out):
        kw, kb = jax.random.split(key)
        bound = 1.0 / jnp.sqrt(fan_in)
        w = jax.random.uniform(kw, (fan_in, fan_out), jnp.float32, -bound, bound)
        b = jax.random.uniform(kb, (1, fan_out), jnp.float32, -bound, bound)
        return w, b

    k1, k2, k3, k4 = jax.random.split(key, 4)
    w1, b1 = linear(k1, input_dim, HIDDEN)
    w2, b2 = linear(k2, HIDDEN, HIDDEN)
    w3, b3 = linear(k3, HIDDEN, HIDDEN)
    w4, b4 = linear(k4, HIDDEN, 1)
    return (w1, b1, w2, b2, w3, b3, w4, b4)


def reference_forward(x, params):
    """Pure-f32 reference (exact PyTorch eval-mode semantics)."""
    w1, b1, w2, b2, w3, b3, w4, b4 = params
    h = jax.nn.relu(x @ w1 + b1)
    h = jax.nn.relu(h @ w2 + b2)
    h = jax.nn.relu(h @ w3 + b3)
    return jax.nn.sigmoid(h @ w4 + b4)


def reference_forward_bf16(x, params):
    """Reference mirroring the kernel's precision (bf16 MXU operands, f32 accum)."""
    w1, b1, w2, b2, w3, b3, w4, b4 = params
    bf, f32 = jnp.bfloat16, jnp.float32
    h = jax.nn.relu(jnp.dot(x.astype(bf), w1.astype(bf), preferred_element_type=f32) + b1)
    h = jax.nn.relu(jnp.dot(h.astype(bf), w2.astype(bf), preferred_element_type=f32) + b2)
    h = jax.nn.relu(jnp.dot(h.astype(bf), w3.astype(bf), preferred_element_type=f32) + b3)
    z = jnp.dot(h.astype(bf), w4.astype(bf), preferred_element_type=f32) + b4
    return jax.nn.sigmoid(z)


if __name__ == "__main__":
    key = jax.random.PRNGKey(0)
    k_x, k_p, k_x2 = jax.random.split(key, 3)

    input_dim = 16  # stands in for x_train_resampled_scaled.shape[1]
    params = init_params(k_p, input_dim)
    prepared = prepare_params(params)   # pad/pack weights once, off the hot path

    # Small sanity case: single tile, row padding only.
    x_small = jax.random.normal(k_x, (8, input_dim), dtype=jnp.float32)
    out_small = jax.block_until_ready(net_forward(x_small, prepared))
    assert out_small.shape == (8, 1)
    assert jnp.allclose(out_small, reference_forward_bf16(x_small, params),
                        atol=1e-4), "mismatch vs bf16-precision reference (small)"
    assert jnp.allclose(out_small, reference_forward(x_small, params),
                        atol=1e-2), "mismatch vs f32 reference (small)"

    # Larger case: multi-tile grid (>=2 steps) + tail-tile row padding.
    x_big = jax.random.normal(k_x2, (1029, input_dim), dtype=jnp.float32)
    out_big = jax.block_until_ready(net_forward(x_big, prepared))
    assert out_big.shape == (1029, 1)
    assert jnp.allclose(out_big, reference_forward_bf16(x_big, params),
                        atol=1e-4), "mismatch vs bf16-precision reference (big)"
    assert jnp.allclose(out_big, reference_forward(x_big, params),
                        atol=1e-2), "mismatch vs f32 reference (big)"

    print("KERNEL_OK")
</pallas_src>

<mosaic_0001>
module attributes {stable_mosaic.version = 11 : i64} {
  func.func @mlp_kernel(%arg0: i32, %arg1: memref<128x16xf32, #tpu.memory_space<vmem>>, %arg2: memref<16x128xbf16, #tpu.memory_space<vmem>>, %arg3: memref<2x128x128xbf16, #tpu.memory_space<vmem>>, %arg4: memref<8x128xbf16, #tpu.memory_space<vmem>>, %arg5: memref<4x128xf32, #tpu.memory_space<vmem>>, %arg6: memref<1x1x128xf32, #tpu.memory_space<vmem>>) attributes {dimension_semantics = [#tpu.dimension_semantics<parallel>], iteration_bounds = array<i64: 1>, scalar_prefetch = 0 : i64, scratch_operands = 0 : i64, tpu.core_type = #tpu.core_type<tc>, window_params = [{transform_indices = @transform_0, window_bounds = array<i64: 128, 16>}, {pipeline_mode = #tpu.pipeline_mode<synchronous>, transform_indices = @transform_1, window_bounds = array<i64: 16, 128>}, {pipeline_mode = #tpu.pipeline_mode<synchronous>, transform_indices = @transform_2, window_bounds = array<i64: 2, 128, 128>}, {pipeline_mode = #tpu.pipeline_mode<synchronous>, transform_indices = @transform_3, window_bounds = array<i64: 8, 128>}, {pipeline_mode = #tpu.pipeline_mode<synchronous>, transform_indices = @transform_4, window_bounds = array<i64: 4, 128>}, {transform_indices = @transform_5, window_bounds = array<i64: 1, 1, 128>}]} {
    %c0 = arith.constant 0 : index
    %c0_0 = arith.constant 0 : index
    %0 = vector.load %arg1[%c0, %c0_0] : memref<128x16xf32, #tpu.memory_space<vmem>>, vector<128x16xf32>
    %1 = arith.truncf %0 : vector<128x16xf32> to vector<128x16xbf16>
    %c0_1 = arith.constant 0 : index
    %c0_2 = arith.constant 0 : index
    %2 = vector.load %arg2[%c0_1, %c0_2] : memref<16x128xbf16, #tpu.memory_space<vmem>>, vector<16x128xbf16>
    %cst = arith.constant dense<0.000000e+00> : vector<128x128xf32>
    %3 = tpu.matmul %1, %2, %cst {dimension_numbers = #tpu.dot_dimension_numbers<[1], [0], [0], [1], [0, 0, 1, 1], [], []>} : vector<128x16xbf16>, vector<16x128xbf16>, vector<128x128xf32> -> vector<128x128xf32>
    %c0_3 = arith.constant 0 : index
    %c0_4 = arith.constant 0 : index
    %4 = vector.load %arg5[%c0_3, %c0_4] : memref<4x128xf32, #tpu.memory_space<vmem>>, vector<1x128xf32>
    %5 = vector.broadcast %4 : vector<1x128xf32> to vector<128x128xf32>
    %6 = arith.addf %3, %5 : vector<128x128xf32>
    %cst_5 = arith.constant 0.000000e+00 : f32
    %7 = vector.broadcast %cst_5 : f32 to vector<128x128xf32>
    %8 = arith.maximumf %6, %7 : vector<128x128xf32>
    %9 = arith.truncf %8 : vector<128x128xf32> to vector<128x128xbf16>
    %c0_6 = arith.constant 0 : index
    %c0_7 = arith.constant 0 : index
    %c0_8 = arith.constant 0 : index
    %10 = vector.load %arg3[%c0_6, %c0_7, %c0_8] : memref<2x128x128xbf16, #tpu.memory_space<vmem>>, vector<1x128x128xbf16>
    %11 = vector.shape_cast %10 : vector<1x128x128xbf16> to vector<128x128xbf16>
    %cst_9 = arith.constant dense<0.000000e+00> : vector<128x128xf32>
    %12 = tpu.matmul %9, %11, %cst_9 {dimension_numbers = #tpu.dot_dimension_numbers<[1], [0], [0], [1], [0, 0, 1, 1], [], []>} : vector<128x128xbf16>, vector<128x128xbf16>, vector<128x128xf32> -> vector<128x128xf32>
    %c1 = arith.constant 1 : index
    %c0_10 = arith.constant 0 : index
    %13 = vector.load %arg5[%c1, %c0_10] : memref<4x128xf32, #tpu.memory_space<vmem>>, vector<1x128xf32>
    %14 = vector.broadcast %13 : vector<1x128xf32> to vector<128x128xf32>
    %15 = arith.addf %12, %14 : vector<128x128xf32>
    %cst_11 = arith.constant 0.000000e+00 : f32
    %16 = vector.broadcast %cst_11 : f32 to vector<128x128xf32>
    %17 = arith.maximumf %15, %16 : vector<128x128xf32>
    %18 = arith.truncf %17 : vector<128x128xf32> to vector<128x128xbf16>
    %c1_12 = arith.constant 1 : index
    %c0_13 = arith.constant 0 : index
    %c0_14 = arith.constant 0 : index
    %19 = vector.load %arg3[%c1_12, %c0_13, %c0_14] : memref<2x128x128xbf16, #tpu.memory_space<vmem>>, vector<1x128x128xbf16>
    %20 = vector.shape_cast %19 : vector<1x128x128xbf16> to vector<128x128xbf16>
    %cst_15 = arith.constant dense<0.000000e+00> : vector<128x128xf32>
    %21 = tpu.matmul %18, %20, %cst_15 {dimension_numbers = #tpu.dot_dimension_numbers<[1], [0], [0], [1], [0, 0, 1, 1], [], []>} : vector<128x128xbf16>, vector<128x128xbf16>, vector<128x128xf32> -> vector<128x128xf32>
    %c2 = arith.constant 2 : index
    %c0_16 = arith.constant 0 : index
    %22 = vector.load %arg5[%c2, %c0_16] : memref<4x128xf32, #tpu.memory_space<vmem>>, vector<1x128xf32>
    %23 = vector.broadcast %22 : vector<1x128xf32> to vector<128x128xf32>
    %24 = arith.addf %21, %23 : vector<128x128xf32>
    %cst_17 = arith.constant 0.000000e+00 : f32
    %25 = vector.broadcast %cst_17 : f32 to vector<128x128xf32>
    %26 = arith.maximumf %24, %25 : vector<128x128xf32>
    %27 = tpu.transpose %26, [1, 0] : vector<128x128xf32> -> vector<128x128xf32>
    %c0_18 = arith.constant 0 : index
    %c0_19 = arith.constant 0 : index
    %28 = vector.load %arg4[%c0_18, %c0_19] : memref<8x128xbf16, #tpu.memory_space<vmem>>, vector<8x128xbf16>
    %29 = arith.truncf %27 : vector<128x128xf32> to vector<128x128xbf16>
    %cst_20 = arith.constant dense<0.000000e+00> : vector<8x128xf32>
    %30 = tpu.matmul %28, %29, %cst_20 {dimension_numbers = #tpu.dot_dimension_numbers<[1], [0], [0], [1], [0, 0, 1, 1], [], []>} : vector<8x128xbf16>, vector<128x128xbf16>, vector<8x128xf32> -> vector<8x128xf32>
    %31 = vector.extract_strided_slice %30 {offsets = [0, 0], sizes = [1, 128], strides = [1, 1]} : vector<8x128xf32> to vector<1x128xf32>
    %c3 = arith.constant 3 : index
    %c0_21 = arith.constant 0 : index
    %32 = vector.load %arg5[%c3, %c0_21] : memref<4x128xf32, #tpu.memory_space<vmem>>, vector<1x1xf32>
    %33 = vector.broadcast %32 : vector<1x1xf32> to vector<1x128xf32>
    %34 = arith.addf %31, %33 : vector<1x128xf32>
    %35 = arith.negf %34 : vector<1x128xf32>
    %36 = math.exp %35 : vector<1x128xf32>
    %cst_22 = arith.constant 1.000000e+00 : f32
    %37 = vector.broadcast %cst_22 : f32 to vector<1x128xf32>
    %38 = arith.addf %37, %36 : vector<1x128xf32>
    %39 = arith.divf %37, %38 : vector<1x128xf32>
    %c0_23 = arith.constant 0 : index
    %c0_24 = arith.constant 0 : index
    %c0_25 = arith.constant 0 : index
    %40 = vector.load %arg6[%c0_23, %c0_24, %c0_25] : memref<1x1x128xf32, #tpu.memory_space<vmem>>, vector<1x1x128xf32>
    %41 = vector.shape_cast %40 : vector<1x1x128xf32> to vector<1x128xf32>
    %42 = vector.shape_cast %39 : vector<1x128xf32> to vector<1x1x128xf32>
    tpu.vector_store %arg6[%c0_23, %c0_24, %c0_25], %42 {strides = array<i32>} : memref<1x1x128xf32, #tpu.memory_space<vmem>>, vector<1x1x128xf32>,
    return
  }
  func.func @transform_0(%arg0: i32) -> (i32, i32) {
    %c0_i32 = arith.constant 0 : i32
    %c0_i32_0 = arith.constant 0 : i32
    return %arg0, %c0_i32 : i32, i32
  }
  func.func @transform_1(%arg0: i32) -> (i32, i32) {
    %c0_i32 = arith.constant 0 : i32
    %c0_i32_0 = arith.constant 0 : i32
    %c0_i32_1 = arith.constant 0 : i32
    return %c0_i32, %c0_i32_0 : i32, i32
  }
  func.func @transform_2(%arg0: i32) -> (i32, i32, i32) {
    %c0_i32 = arith.constant 0 : i32
    %c0_i32_0 = arith.constant 0 : i32
    %c0_i32_1 = arith.constant 0 : i32
    %c0_i32_2 = arith.constant 0 : i32
    return %c0_i32, %c0_i32_0, %c0_i32_1 : i32, i32, i32
  }
  func.func @transform_3(%arg0: i32) -> (i32, i32) {
    %c0_i32 = arith.constant 0 : i32
    %c0_i32_0 = arith.constant 0 : i32
    %c0_i32_1 = arith.constant 0 : i32
    return %c0_i32, %c0_i32_0 : i32, i32
  }
  func.func @transform_4(%arg0: i32) -> (i32, i32) {
    %c0_i32 = arith.constant 0 : i32
    %c0_i32_0 = arith.constant 0 : i32
    %c0_i32_1 = arith.constant 0 : i32
    return %c0_i32, %c0_i32_0 : i32, i32
  }
  func.func @transform_5(%arg0: i32) -> (i32, i32, i32) {
    %c0_i32 = arith.constant 0 : i32
    %c0_i32_0 = arith.constant 0 : i32
    %c0_i32_1 = arith.constant 0 : i32
    return %arg0, %c0_i32, %c0_i32_0 : i32, i32, i32
  }
}

</mosaic_0001>

<llo_original>
// kernel: tpu_custom_call.1
$region0: #{tpu_custom_call.1}
  #allocation0 [shape = 'u32[]', space=smem, size = 0x4, offset = 0x4, fixed_abs, tag = 'smem constant byte address 0x4 - core index']
  #allocation1 [shape = 'u32[144,128]{1,0:T(1,128)}', space=vmem, size = 0x12000, scoped, tag = 'internal scratch']
  %s0 = inlined_call_operand.vmem [shape: f32[128,16], index: 0, kind: input, shape index: {}]
  %s1 = inlined_call_operand.vmem [shape: bf16[16,128], index: 1, kind: input, shape index: {}]
  %s2 = inlined_call_operand.vmem [shape: bf16[2,128,128], index: 2, kind: input, shape index: {}]
  %s3 = inlined_call_operand.vmem [shape: bf16[8,128], index: 3, kind: input, shape index: {}]
  %s4 = inlined_call_operand.vmem [shape: f32[4,128], index: 4, kind: input, shape index: {}]
  %s5 = inlined_call_operand.hbm [shape: f32[1,1,128], index: 5, kind: output, shape index: {}]
  %s6 = sld [smem:[#allocation0]]
  $region30: #{tpu_custom_call.1} parent=0
    _
  %s8 = ssub.s32 1, %s6
  %s9 = scalar_select 0, %s8, %s6
  $region1: #{tpu_custom_call.1} parent=0
    #allocation2 [shape = 'u8[512]{0}', space=vmem, size = 0x400, scoped, tag = 'output window, operand 0, single buffered']
    #allocation3 [shape = 's32[1]{0}', space=sflag, size = 0x4, scoped, tag = 'scoped memory for tpu_custom_call.1']
    %10 = vsyncpa [#allocation3], 0
    // Predicated region
    $region2: #{tpu_custom_call.1} parent=1 // pred_check
      _
    $region3: #{tpu_custom_call.1} parent=1 // pred_check_branch
      %12 = sbr.rel (0) target = $region5
    $region4: #{tpu_custom_call.1} parent=1 // pred_region
      _
    $region5: #{tpu_custom_call.1} parent=1 // pred_fallthru
      _
    // Predicated region
    $region6: #{tpu_custom_call.1} parent=1 // pred_check
      _
    $region7: #{tpu_custom_call.1} parent=1 // pred_check_branch
      %14 = sbr.rel (0) target = $region9
    $region8: #{tpu_custom_call.1} parent=1 // pred_region
      _
    $region9: #{tpu_custom_call.1} parent=1 // pred_fallthru
      _
    // Predicated region
    $region10: #{tpu_custom_call.1} parent=1 // pred_check
      _
    $region11: #{tpu_custom_call.1} parent=1 // pred_check_branch
      %16 = sbr.rel (0) target = $region13
    $region12: #{tpu_custom_call.1} parent=1 // pred_region
      _
    $region13: #{tpu_custom_call.1} parent=1 // pred_fallthru
      _
    // Predicated region
    $region14: #{tpu_custom_call.1} parent=1 // pred_check
      _
    $region15: #{tpu_custom_call.1} parent=1 // pred_check_branch
      %18 = sbr.rel (0) target = $region17
    $region16: #{tpu_custom_call.1} parent=1 // pred_region
      _
    $region17: #{tpu_custom_call.1} parent=1 // pred_fallthru
      _
    // Predicated region
    $region18: #{tpu_custom_call.1} parent=1 // pred_check
      _
    $region19: #{tpu_custom_call.1} parent=1 // pred_check_branch
      %20 = sbr.rel (0) target = $region21
    $region20: #{tpu_custom_call.1} parent=1 // pred_region
      _
    $region21: #{tpu_custom_call.1} parent=1 // pred_fallthru
      _
    %v22 = vld [vmem:[%s0] sm:$0xff]
    %v23 = vld [vmem:[%s0 + $0x8] sm:$0xff]
    %v24 = vld [vmem:[%s0 + $0x10] sm:$0xff]
    %v25 = vld [vmem:[%s0 + $0x18] sm:$0xff]
    %v26 = vld [vmem:[%s0 + $0x20] sm:$0xff]
    %v27 = vld [vmem:[%s0 + $0x28] sm:$0xff]
    %v28 = vld [vmem:[%s0 + $0x30] sm:$0xff]
    %v29 = vld [vmem:[%s0 + $0x38] sm:$0xff]
    %v30 = vld [vmem:[%s0 + $0x40] sm:$0xff]
    %v31 = vld [vmem:[%s0 + $0x48] sm:$0xff]
    %v32 = vld [vmem:[%s0 + $0x50] sm:$0xff]
    %v33 = vld [vmem:[%s0 + $0x58] sm:$0xff]
    %v34 = vld [vmem:[%s0 + $0x60] sm:$0xff]
    %v35 = vld [vmem:[%s0 + $0x68] sm:$0xff]
    %v36 = vld [vmem:[%s0 + $0x70] sm:$0xff]
    %v37 = vld [vmem:[%s0 + $0x78] sm:$0xff]
    %v38 = vpack.c.bf16 %v23, %v22
    %v39 = vpack.c.bf16 %v25, %v24
    %v40 = vpack.c.bf16 %v27, %v26
    %v41 = vpack.c.bf16 %v29, %v28
    %v42 = vpack.c.bf16 %v31, %v30
    %v43 = vpack.c.bf16 %v33, %v32
    %v44 = vpack.c.bf16 %v35, %v34
    %v45 = vpack.c.bf16 %v37, %v36
    %v46 = vld [vmem:[%s1] sm:$0xf]
    %v47 = vld [vmem:[%s1 + $0x4] sm:$0xf]
    %v48 = vld [vmem:[%s4] sm:$0x1]
    %v49 = vlaneseq
    %v50 = vshrl.u32 %v49, 7
    %v51 = vsub.s32 0, %v50
    %v52 = vrot.slane %v48, %v51
    %v55 = vunpack.c.l.b16 %v46
    %v56 = vunpack.c.l.b16 %v47
    %v57 = vpack.c.b16 %v56, %v55
    %vm59 = vcmask 130048
    %v61 = vsel %vm59, %v38, 0
    %v64 = vsel %vm59, %v39, 0
    %v67 = vsel %vm59, %v40, 0
    %v70 = vsel %vm59, %v41, 0
    %v73 = vsel %vm59, %v42, 0
    %v76 = vsel %vm59, %v43, 0
    %v79 = vsel %vm59, %v44, 0
    %v82 = vsel %vm59, %v45, 0
    %84 = vmatprep.subr.bf16.mxu0 0
    %85 = vmatpush1.bf16.msra.mxu0 %v57
    %86 = vmatprep.subr.bf16.mxu0 0
    %87 = vmatpush1.bf16.msra.mxu0 0
    %88 = vmatprep.subr.bf16.mxu0 0
    %89 = vmatpush1.bf16.msra.mxu0 0
    %90 = vmatprep.subr.bf16.mxu0 0
    %91 = vmatpush1.bf16.msra.mxu0 0
    %92 = vmatprep.subr.bf16.mxu0 0
    %93 = vmatpush1.bf16.msra.mxu0 0
    %94 = vmatprep.subr.bf16.mxu0 0
    %95 = vmatpush1.bf16.msra.mxu0 0
    %96 = vmatprep.subr.bf16.mxu0 0
    %97 = vmatpush1.bf16.msra.mxu0 0
    %98 = vmatprep.subr.bf16.mxu0 0
    %99 = vmatpush1.bf16.msra.mxu0 0
    %100 = vmatprep.subr.bf16.mxu0 0
    %101 = vmatpush1.bf16.msra.mxu0 0
    %102 = vmatprep.subr.bf16.mxu0 0
    %103 = vmatpush1.bf16.msra.mxu0 0
    %104 = vmatprep.subr.bf16.mxu0 0
    %105 = vmatpush1.bf16.msra.mxu0 0
    %106 = vmatprep.subr.bf16.mxu0 0
    %107 = vmatpush1.bf16.msra.mxu0 0
    %108 = vmatprep.subr.bf16.mxu0 0
    %109 = vmatpush1.bf16.msra.mxu0 0
    %110 = vmatprep.subr.bf16.mxu0 0
    %111 = vmatpush1.bf16.msra.mxu0 0
    %112 = vmatprep.subr.bf16.mxu0 0
    %113 = vmatpush1.bf16.msra.mxu0 0
    %114 = vmatprep.subr.bf16.mxu0 0
    %115 = vmatpush1.bf16.msra.mxu0 0
    %116 = vmatprep.mubr.bf16.mxu0 0
    %117 = vmatmul.mubr.bf16.gmra.mrb[0].mxu0 %v61
    %v118 = vpop.f32.mrb[0].mxu0
    %v119 = vadd.f32 %v52, %v118
    %v120 = vpop.f32.mrb[0].mxu0
    %v121 = vpop.f32.mrb[0].mxu0
    %v122 = vadd.f32 %v52, %v121
    %v123 = vpop.f32.mrb[0].mxu0
    %124 = vmatprep.mubr.bf16.mxu0 0
    %125 = vmatmul.mubr.bf16.gmra.mrb[0].mxu0 %v64
    %v126 = vpop.f32.mrb[0].mxu0
    %v127 = vadd.f32 %v52, %v126
    %v128 = vpop.f32.mrb[0].mxu0
    %v129 = vpop.f32.mrb[0].mxu0
    %v130 = vadd.f32 %v52, %v129
    %v131 = vpop.f32.mrb[0].mxu0
    %132 = vmatprep.mubr.bf16.mxu0 0
    %133 = vmatmul.mubr.bf16.gmra.mrb[0].mxu0 %v67
    %v134 = vpop.f32.mrb[0].mxu0
    %v135 = vadd.f32 %v52, %v134
    %v136 = vpop.f32.mrb[0].mxu0
    %v137 = vpop.f32.mrb[0].mxu0
    %v138 = vadd.f32 %v52, %v137
    %v139 = vpop.f32.mrb[0].mxu0
    %140 = vmatprep.mubr.bf16.mxu0 0
    %141 = vmatmul.mubr.bf16.gmra.mrb[0].mxu0 %v70
    %v142 = vpop.f32.mrb[0].mxu0
    %v143 = vadd.f32 %v52, %v142
    %v144 = vpop.f32.mrb[0].mxu0
    %v145 = vpop.f32.mrb[0].mxu0
    %v146 = vadd.f32 %v52, %v145
    %v147 = vpop.f32.mrb[0].mxu0
    %148 = vmatprep.mubr.bf16.mxu0 0
    %149 = vmatmul.mubr.bf16.gmra.mrb[0].mxu0 %v73
    %v150 = vpop.f32.mrb[0].mxu0
    %v151 = vadd.f32 %v52, %v150
    %v152 = vpop.f32.mrb[0].mxu0
    %v153 = vpop.f32.mrb[0].mxu0
    %v154 = vadd.f32 %v52, %v153
    %v155 = vpop.f32.mrb[0].mxu0
    %156 = vmatprep.mubr.bf16.mxu0 0
    %157 = vmatmul.mubr.bf16.gmra.mrb[0].mxu0 %v76
    %v158 = vpop.f32.mrb[0].mxu0
    %v159 = vadd.f32 %v52, %v158
    %v160 = vpop.f32.mrb[0].mxu0
    %v161 = vpop.f32.mrb[0].mxu0
    %v162 = vadd.f32 %v52, %v161
    %v163 = vpop.f32.mrb[0].mxu0
    %164 = vmatprep.mubr.bf16.mxu0 0
    %165 = vmatmul.mubr.bf16.gmra.mrb[0].mxu0 %v79
    %v166 = vpop.f32.mrb[0].mxu0
    %v167 = vadd.f32 %v52, %v166
    %v168 = vpop.f32.mrb[0].mxu0
    %v169 = vpop.f32.mrb[0].mxu0
    %v170 = vadd.f32 %v52, %v169
    %v171 = vpop.f32.mrb[0].mxu0
    %172 = vmatprep.mubr.bf16.mxu0 0
    %173 = vmatmul.mubr.bf16.gmra.mrb[0].mxu0 %v82
    %v174 = vpop.f32.mrb[0].mxu0
    %v175 = vadd.f32 %v52, %v174
    %v176 = vpop.f32.mrb[0].mxu0
    %v177 = vpop.f32.mrb[0].mxu0
    %v178 = vadd.f32 %v52, %v177
    %v179 = vpop.f32.mrb[0].mxu0
    %180 = vdwg.mxu0
    %v181 = vmax.f32 %v119, 0.0
    %v182 = vmax.f32 %v122, 0.0
    %v183 = vmax.f32 %v127, 0.0
    %v184 = vmax.f32 %v130, 0.0
    %v185 = vmax.f32 %v135, 0.0
    %v186 = vmax.f32 %v138, 0.0
    %v187 = vmax.f32 %v143, 0.0
    %v188 = vmax.f32 %v146, 0.0
    %v189 = vmax.f32 %v151, 0.0
    %v190 = vmax.f32 %v154, 0.0
    %v191 = vmax.f32 %v159, 0.0
    %v192 = vmax.f32 %v162, 0.0
    %v193 = vmax.f32 %v167, 0.0
    %v194 = vmax.f32 %v170, 0.0
    %v195 = vmax.f32 %v175, 0.0
    %v196 = vmax.f32 %v178, 0.0
    %v197 = vpack.c.bf16 %v182, %v181
    %v198 = vpack.c.bf16 %v184, %v183
    %v199 = vpack.c.bf16 %v186, %v185
    %v200 = vpack.c.bf16 %v188, %v187
    %v201 = vpack.c.bf16 %v190, %v189
    %v202 = vpack.c.bf16 %v192, %v191
    %v203 = vpack.c.bf16 %v194, %v193
    %v204 = vpack.c.bf16 %v196, %v195
    %v205 = vld [vmem:[%s2] sm:$0xf]
    %v206 = vld [vmem:[%s2 + $0x4] sm:$0xf]
    %v207 = vld [vmem:[%s2 + $0x8] sm:$0xf]
    %v208 = vld [vmem:[%s2 + $0xc] sm:$0xf]
    %v209 = vld [vmem:[%s2 + $0x10] sm:$0xf]
    %v210 = vld [vmem:[%s2 + $0x14] sm:$0xf]
    %v211 = vld [vmem:[%s2 + $0x18] sm:$0xf]
    %v212 = vld [vmem:[%s2 + $0x1c] sm:$0xf]
    %v213 = vld [vmem:[%s2 + $0x20] sm:$0xf]
    %v214 = vld [vmem:[%s2 + $0x24] sm:$0xf]
    %v215 = vld [vmem:[%s2 + $0x28] sm:$0xf]
    %v216 = vld [vmem:[%s2 + $0x2c] sm:$0xf]
    %v217 = vld [vmem:[%s2 + $0x30] sm:$0xf]
    %v218 = vld [vmem:[%s2 + $0x34] sm:$0xf]
    %v219 = vld [vmem:[%s2 + $0x38] sm:$0xf]
    %v220 = vld [vmem:[%s2 + $0x3c] sm:$0xf]
    %v221 = vld [vmem:[%s4 + $0x1] sm:$0x1]
    %v222 = vlaneseq
    %v223 = vshrl.u32 %v222, 7
    %v224 = vsub.s32 0, %v223
    %v225 = vrot.slane %v221, %v224
    %v242 = vunpack.c.l.b16 %v205
    %v243 = vunpack.c.l.b16 %v206
    %v244 = vunpack.c.l.b16 %v207
    %v245 = vunpack.c.l.b16 %v208
    %v246 = vunpack.c.l.b16 %v209
    %v247 = vunpack.c.l.b16 %v210
    %v248 = vunpack.c.l.b16 %v211
    %v249 = vunpack.c.l.b16 %v212
    %v250 = vunpack.c.l.b16 %v213
    %v251 = vunpack.c.l.b16 %v214
    %v252 = vunpack.c.l.b16 %v215
    %v253 = vunpack.c.l.b16 %v216
    %v254 = vunpack.c.l.b16 %v217
    %v255 = vunpack.c.l.b16 %v218
    %v256 = vunpack.c.l.b16 %v219
    %v257 = vunpack.c.l.b16 %v220
    %v258 = vpack.c.b16 %v243, %v242
    %v259 = vpack.c.b16 %v245, %v244
    %v260 = vpack.c.b16 %v247, %v246
    %v261 = vpack.c.b16 %v249, %v248
    %v262 = vpack.c.b16 %v251, %v250
    %v263 = vpack.c.b16 %v253, %v252
    %v264 = vpack.c.b16 %v255, %v254
    %v265 = vpack.c.b16 %v257, %v256
    %274 = vmatprep.subr.bf16.mxu0 0
    %275 = vmatpush1.bf16.msra.mxu0 %v258
    %276 = vmatprep.subr.bf16.mxu0 0
    %277 = vmatpush1.bf16.msra.mxu0 %v259
    %278 = vmatprep.subr.bf16.mxu0 0
    %279 = vmatpush1.bf16.msra.mxu0 %v260
    %280 = vmatprep.subr.bf16.mxu0 0
    %281 = vmatpush1.bf16.msra.mxu0 %v261
    %282 = vmatprep.subr.bf16.mxu0 0
    %283 = vmatpush1.bf16.msra.mxu0 %v262
    %284 = vmatprep.subr.bf16.mxu0 0
    %285 = vmatpush1.bf16.msra.mxu0 %v263
    %286 = vmatprep.subr.bf16.mxu0 0
    %287 = vmatpush1.bf16.msra.mxu0 %v264
    %288 = vmatprep.subr.bf16.mxu0 0
    %289 = vmatpush1.bf16.msra.mxu0 %v265
    %290 = vmatprep.subr.bf16.mxu0 0
    %291 = vmatpush1.bf16.msra.mxu0 0
    %292 = vmatprep.subr.bf16.mxu0 0
    %293 = vmatpush1.bf16.msra.mxu0 0
    %294 = vmatprep.subr.bf16.mxu0 0
    %295 = vmatpush1.bf16.msra.mxu0 0
    %296 = vmatprep.subr.bf16.mxu0 0
    %297 = vmatpush1.bf16.msra.mxu0 0
    %298 = vmatprep.subr.bf16.mxu0 0
    %299 = vmatpush1.bf16.msra.mxu0 0
    %300 = vmatprep.subr.bf16.mxu0 0
    %301 = vmatpush1.bf16.msra.mxu0 0
    %302 = vmatprep.subr.bf16.mxu0 0
    %303 = vmatpush1.bf16.msra.mxu0 0
    %304 = vmatprep.subr.bf16.mxu0 0
    %305 = vmatpush1.bf16.msra.mxu0 0
    %306 = vmatprep.mubr.bf16.mxu0 0
    %307 = vmatmul.mubr.bf16.gmra.mrb[0].mxu0 %v197
    %v308 = vpop.f32.mrb[0].mxu0
    %v309 = vadd.f32 %v225, %v308
    %v310 = vpop.f32.mrb[0].mxu0
    %v311 = vpop.f32.mrb[0].mxu0
    %v312 = vadd.f32 %v225, %v311
    %v313 = vpop.f32.mrb[0].mxu0
    %314 = vmatprep.mubr.bf16.mxu0 0
    %315 = vmatmul.mubr.bf16.gmra.mrb[0].mxu0 %v198
    %v316 = vpop.f32.mrb[0].mxu0
    %v317 = vadd.f32 %v225, %v316
    %v318 = vpop.f32.mrb[0].mxu0
    %v319 = vpop.f32.mrb[0].mxu0
    %v320 = vadd.f32 %v225, %v319
    %v321 = vpop.f32.mrb[0].mxu0
    %322 = vmatprep.mubr.bf16.mxu0 0
    %323 = vmatmul.mubr.bf16.gmra.mrb[0].mxu0 %v199
    %v324 = vpop.f32.mrb[0].mxu0
    %v325 = vadd.f32 %v225, %v324
    %v326 = vpop.f32.mrb[0].mxu0
    %v327 = vpop.f32.mrb[0].mxu0
    %v328 = vadd.f32 %v225, %v327
    %v329 = vpop.f32.mrb[0].mxu0
    %330 = vmatprep.mubr.bf16.mxu0 0
    %331 = vmatmul.mubr.bf16.gmra.mrb[0].mxu0 %v200
    %v332 = vpop.f32.mrb[0].mxu0
    %v333 = vadd.f32 %v225, %v332
    %v334 = vpop.f32.mrb[0].mxu0
    %v335 = vpop.f32.mrb[0].mxu0
    %v336 = vadd.f32 %v225, %v335
    %v337 = vpop.f32.mrb[0].mxu0
    %338 = vmatprep.mubr.bf16.mxu0 0
    %339 = vmatmul.mubr.bf16.gmra.mrb[0].mxu0 %v201
    %v340 = vpop.f32.mrb[0].mxu0
    %v341 = vadd.f32 %v225, %v340
    %v342 = vpop.f32.mrb[0].mxu0
    %v343 = vpop.f32.mrb[0].mxu0
    %v344 = vadd.f32 %v225, %v343
    %v345 = vpop.f32.mrb[0].mxu0
    %346 = vmatprep.mubr.bf16.mxu0 0
    %347 = vmatmul.mubr.bf16.gmra.mrb[0].mxu0 %v202
    %v348 = vpop.f32.mrb[0].mxu0
    %v349 = vadd.f32 %v225, %v348
    %v350 = vpop.f32.mrb[0].mxu0
    %v351 = vpop.f32.mrb[0].mxu0
    %v352 = vadd.f32 %v225, %v351
    %v353 = vpop.f32.mrb[0].mxu0
    %354 = vmatprep.mubr.bf16.mxu0 0
    %355 = vmatmul.mubr.bf16.gmra.mrb[0].mxu0 %v203
    %v356 = vpop.f32.mrb[0].mxu0
    %v357 = vadd.f32 %v225, %v356
    %v358 = vpop.f32.mrb[0].mxu0
    %v359 = vpop.f32.mrb[0].mxu0
    %v360 = vadd.f32 %v225, %v359
    %v361 = vpop.f32.mrb[0].mxu0
    %362 = vmatprep.mubr.bf16.mxu0 0
    %363 = vmatmul.mubr.bf16.gmra.mrb[0].mxu0 %v204
    %v364 = vpop.f32.mrb[0].mxu0
    %v365 = vadd.f32 %v225, %v364
    %v366 = vpop.f32.mrb[0].mxu0
    %v367 = vpop.f32.mrb[0].mxu0
    %v368 = vadd.f32 %v225, %v367
    %v369 = vpop.f32.mrb[0].mxu0
    %370 = vdwg.mxu0
    %v371 = vmax.f32 %v309, 0.0
    %v372 = vmax.f32 %v312, 0.0
    %v373 = vmax.f32 %v317, 0.0
    %v374 = vmax.f32 %v320, 0.0
    %v375 = vmax.f32 %v325, 0.0
    %v376 = vmax.f32 %v328, 0.0
    %v377 = vmax.f32 %v333, 0.0
    %v378 = vmax.f32 %v336, 0.0
    %v379 = vmax.f32 %v341, 0.0
    %v380 = vmax.f32 %v344, 0.0
    %v381 = vmax.f32 %v349, 0.0
    %v382 = vmax.f32 %v352, 0.0
    %v383 = vmax.f32 %v357, 0.0
    %v384 = vmax.f32 %v360, 0.0
    %v385 = vmax.f32 %v365, 0.0
    %v386 = vmax.f32 %v368, 0.0
    %v387 = vpack.c.bf16 %v372, %v371
    %v388 = vpack.c.bf16 %v374, %v373
    %v389 = vpack.c.bf16 %v376, %v375
    %v390 = vpack.c.bf16 %v378, %v377
    %v391 = vpack.c.bf16 %v380, %v379
    %v392 = vpack.c.bf16 %v382, %v381
    %v393 = vpack.c.bf16 %v384, %v383
    %v394 = vpack.c.bf16 %v386, %v385
    %s395 = scalar_lea.vmem %s2, 64
    %v396 = vld [vmem:[%s395] sm:$0xf]
    %v397 = vld [vmem:[%s395 + $0x4] sm:$0xf]
    %v398 = vld [vmem:[%s395 + $0x8] sm:$0xf]
    %v399 = vld [vmem:[%s395 + $0xc] sm:$0xf]
    %v400 = vld [vmem:[%s395 + $0x10] sm:$0xf]
    %v401 = vld [vmem:[%s395 + $0x14] sm:$0xf]
    %v402 = vld [vmem:[%s395 + $0x18] sm:$0xf]
    %v403 = vld [vmem:[%s395 + $0x1c] sm:$0xf]
    %v404 = vld [vmem:[%s395 + $0x20] sm:$0xf]
    %v405 = vld [vmem:[%s395 + $0x24] sm:$0xf]
    %v406 = vld [vmem:[%s395 + $0x28] sm:$0xf]
    %v407 = vld [vmem:[%s395 + $0x2c] sm:$0xf]
    %v408 = vld [vmem:[%s395 + $0x30] sm:$0xf]
    %v409 = vld [vmem:[%s395 + $0x34] sm:$0xf]
    %v410 = vld [vmem:[%s395 + $0x38] sm:$0xf]
    %v411 = vld [vmem:[%s395 + $0x3c] sm:$0xf]
    %v412 = vld [vmem:[%s4 + $0x2] sm:$0x1]
    %v413 = vlaneseq
    %v414 = vshrl.u32 %v413, 7
    %v415 = vsub.s32 0, %v414
    %v416 = vrot.slane %v412, %v415
    %v433 = vunpack.c.l.b16 %v396
    %v434 = vunpack.c.l.b16 %v397
    %v435 = vunpack.c.l.b16 %v398
    %v436 = vunpack.c.l.b16 %v399
    %v437 = vunpack.c.l.b16 %v400
    %v438 = vunpack.c.l.b16 %v401
    %v439 = vunpack.c.l.b16 %v402
    %v440 = vunpack.c.l.b16 %v403
    %v441 = vunpack.c.l.b16 %v404
    %v442 = vunpack.c.l.b16 %v405
    %v443 = vunpack.c.l.b16 %v406
    %v444 = vunpack.c.l.b16 %v407
    %v445 = vunpack.c.l.b16 %v408
    %v446 = vunpack.c.l.b16 %v409
    %v447 = vunpack.c.l.b16 %v410
    %v448 = vunpack.c.l.b16 %v411
    %v449 = vpack.c.b16 %v434, %v433
    %v450 = vpack.c.b16 %v436, %v435
    %v451 = vpack.c.b16 %v438, %v437
    %v452 = vpack.c.b16 %v440, %v439
    %v453 = vpack.c.b16 %v442, %v441
    %v454 = vpack.c.b16 %v444, %v443
    %v455 = vpack.c.b16 %v446, %v445
    %v456 = vpack.c.b16 %v448, %v447
    %465 = vmatprep.subr.bf16.mxu0 0
    %466 = vmatpush1.bf16.msra.mxu0 %v449
    %467 = vmatprep.subr.bf16.mxu0 0
    %468 = vmatpush1.bf16.msra.mxu0 %v450
    %469 = vmatprep.subr.bf16.mxu0 0
    %470 = vmatpush1.bf16.msra.mxu0 %v451
    %471 = vmatprep.subr.bf16.mxu0 0
    %472 = vmatpush1.bf16.msra.mxu0 %v452
    %473 = vmatprep.subr.bf16.mxu0 0
    %474 = vmatpush1.bf16.msra.mxu0 %v453
    %475 = vmatprep.subr.bf16.mxu0 0
    %476 = vmatpush1.bf16.msra.mxu0 %v454
    %477 = vmatprep.subr.bf16.mxu0 0
    %478 = vmatpush1.bf16.msra.mxu0 %v455
    %479 = vmatprep.subr.bf16.mxu0 0
    %480 = vmatpush1.bf16.msra.mxu0 %v456
    %481 = vmatprep.subr.bf16.mxu0 0
    %482 = vmatpush1.bf16.msra.mxu0 0
    %483 = vmatprep.subr.bf16.mxu0 0
    %484 = vmatpush1.bf16.msra.mxu0 0
    %485 = vmatprep.subr.bf16.mxu0 0
    %486 = vmatpush1.bf16.msra.mxu0 0
    %487 = vmatprep.subr.bf16.mxu0 0
    %488 = vmatpush1.bf16.msra.mxu0 0
    %489 = vmatprep.subr.bf16.mxu0 0
    %490 = vmatpush1.bf16.msra.mxu0 0
    %491 = vmatprep.subr.bf16.mxu0 0
    %492 = vmatpush1.bf16.msra.mxu0 0
    %493 = vmatprep.subr.bf16.mxu0 0
    %494 = vmatpush1.bf16.msra.mxu0 0
    %495 = vmatprep.subr.bf16.mxu0 0
    %496 = vmatpush1.bf16.msra.mxu0 0
    %497 = vmatprep.mubr.bf16.mxu0 0
    %498 = vmatmul.mubr.bf16.gmra.mrb[0].mxu0 %v387
    %v499 = vpop.f32.mrb[0].mxu0
    %v500 = vadd.f32 %v416, %v499
    %v501 = vpop.f32.mrb[0].mxu0
    %v502 = vpop.f32.mrb[0].mxu0
    %v503 = vadd.f32 %v416, %v502
    %v504 = vpop.f32.mrb[0].mxu0
    %505 = vmatprep.mubr.bf16.mxu0 0
    %506 = vmatmul.mubr.bf16.gmra.mrb[0].mxu0 %v388
    %v507 = vpop.f32.mrb[0].mxu0
    %v508 = vadd.f32 %v416, %v507
    %v509 = vpop.f32.mrb[0].mxu0
    %v510 = vpop.f32.mrb[0].mxu0
    %v511 = vadd.f32 %v416, %v510
    %v512 = vpop.f32.mrb[0].mxu0
    %513 = vmatprep.mubr.bf16.mxu0 0
    %514 = vmatmul.mubr.bf16.gmra.mrb[0].mxu0 %v389
    %v515 = vpop.f32.mrb[0].mxu0
    %v516 = vadd.f32 %v416, %v515
    %v517 = vpop.f32.mrb[0].mxu0
    %v518 = vpop.f32.mrb[0].mxu0
    %v519 = vadd.f32 %v416, %v518
    %v520 = vpop.f32.mrb[0].mxu0
    %521 = vmatprep.mubr.bf16.mxu0 0
    %522 = vmatmul.mubr.bf16.gmra.mrb[0].mxu0 %v390
    %v523 = vpop.f32.mrb[0].mxu0
    %v524 = vadd.f32 %v416, %v523
    %v525 = vpop.f32.mrb[0].mxu0
    %v526 = vpop.f32.mrb[0].mxu0
    %v527 = vadd.f32 %v416, %v526
    %v528 = vpop.f32.mrb[0].mxu0
    %529 = vmatprep.mubr.bf16.mxu0 0
    %530 = vmatmul.mubr.bf16.gmra.mrb[0].mxu0 %v391
    %v531 = vpop.f32.mrb[0].mxu0
    %v532 = vadd.f32 %v416, %v531
    %v533 = vpop.f32.mrb[0].mxu0
    %v534 = vpop.f32.mrb[0].mxu0
    %v535 = vadd.f32 %v416, %v534
    %v536 = vpop.f32.mrb[0].mxu0
    %537 = vmatprep.mubr.bf16.mxu0 0
    %538 = vmatmul.mubr.bf16.gmra.mrb[0].mxu0 %v392
    %v539 = vpop.f32.mrb[0].mxu0
    %v540 = vadd.f32 %v416, %v539
    %v541 = vpop.f32.mrb[0].mxu0
    %v542 = vpop.f32.mrb[0].mxu0
    %v543 = vadd.f32 %v416, %v542
    %v544 = vpop.f32.mrb[0].mxu0
    %545 = vmatprep.mubr.bf16.mxu0 0
    %546 = vmatmul.mubr.bf16.gmra.mrb[0].mxu0 %v393
    %v547 = vpop.f32.mrb[0].mxu0
    %v548 = vadd.f32 %v416, %v547
    %v549 = vpop.f32.mrb[0].mxu0
    %v550 = vpop.f32.mrb[0].mxu0
    %v551 = vadd.f32 %v416, %v550
    %v552 = vpop.f32.mrb[0].mxu0
    %553 = vmatprep.mubr.bf16.mxu0 0
    %554 = vmatmul.mubr.bf16.gmra.mrb[0].mxu0 %v394
    %v555 = vpop.f32.mrb[0].mxu0
    %v556 = vadd.f32 %v416, %v555
    %v557 = vpop.f32.mrb[0].mxu0
    %v558 = vpop.f32.mrb[0].mxu0
    %v559 = vadd.f32 %v416, %v558
    %v560 = vpop.f32.mrb[0].mxu0
    %561 = vdwg.mxu0
    %v562 = vmax.f32 %v500, 0.0
    %v563 = vmax.f32 %v503, 0.0
    %v564 = vmax.f32 %v508, 0.0
    %v565 = vmax.f32 %v511, 0.0
    %v566 = vmax.f32 %v516, 0.0
    %v567 = vmax.f32 %v519, 0.0
    %v568 = vmax.f32 %v524, 0.0
    %v569 = vmax.f32 %v527, 0.0
    %v570 = vmax.f32 %v532, 0.0
    %v571 = vmax.f32 %v535, 0.0
    %v572 = vmax.f32 %v540, 0.0
    %v573 = vmax.f32 %v543, 0.0
    %v574 = vmax.f32 %v548, 0.0
    %v575 = vmax.f32 %v551, 0.0
    %v576 = vmax.f32 %v556, 0.0
    %v577 = vmax.f32 %v559, 0.0
    %578 = vxpose.xlu0.b32.start [1/16] %v562, 128
    %579 = vxpose.xlu0.b32.cont [2/16] %v563, 128
    %580 = vxpose.xlu0.b32.cont [3/16] %v564, 128
    %581 = vxpose.xlu0.b32.cont [4/16] %v565, 128
    %582 = vxpose.xlu0.b32.cont [5/16] %v566, 128
    %583 = vxpose.xlu0.b32.cont [6/16] %v567, 128
    %584 = vxpose.xlu0.b32.cont [7/16] %v568, 128
    %585 = vxpose.xlu0.b32.cont [8/16] %v569, 128
    %586 = vxpose.xlu0.b32.cont [9/16] %v570, 128
    %587 = vxpose.xlu0.b32.cont [10/16] %v571, 128
    %588 = vxpose.xlu0.b32.cont [11/16] %v572, 128
    %589 = vxpose.xlu0.b32.cont [12/16] %v573, 128
    %590 = vxpose.xlu0.b32.cont [13/16] %v574, 128
    %591 = vxpose.xlu0.b32.cont [14/16] %v575, 128
    %592 = vxpose.xlu0.b32.cont [15/16] %v576, 128
    %593 = vxpose.xlu0.b32.end [16/16] %v577, 128
    %v594 = vpop.trf.xlu0
    %v595 = vpop.trf.xlu0
    %v596 = vpop.trf.xlu0
    %v597 = vpop.trf.xlu0
    %v598 = vpop.trf.xlu0
    %v599 = vpop.trf.xlu0
    %v600 = vpop.trf.xlu0
    %v601 = vpop.trf.xlu0
    %v602 = vpop.trf.xlu0
    %v603 = vpop.trf.xlu0
    %v604 = vpop.trf.xlu0
    %v605 = vpop.trf.xlu0
    %v606 = vpop.trf.xlu0
    %v607 = vpop.trf.xlu0
    %v608 = vpop.trf.xlu0
    %v609 = vpop.trf.xlu0
    %v610 = vld [vmem:[%s3] sm:$0xf]
    %v611 = vpack.c.bf16 %v595, %v594
    %v612 = vpack.c.bf16 %v597, %v596
    %v613 = vpack.c.bf16 %v599, %v598
    %v614 = vpack.c.bf16 %v601, %v600
    %v615 = vpack.c.bf16 %v603, %v602
    %v616 = vpack.c.bf16 %v605, %v604
    %v617 = vpack.c.bf16 %v607, %v606
    %v618 = vpack.c.bf16 %v609, %v608
    %619 = vmatprep.subr.bf16.mxu0 0
    %620 = vmatpush1.bf16.msra.mxu0 %v611
    %621 = vmatprep.subr.bf16.mxu0 0
    %622 = vmatpush1.bf16.msra.mxu0 %v612
    %623 = vmatprep.subr.bf16.mxu0 0
    %624 = vmatpush1.bf16.msra.mxu0 %v613
    %625 = vmatprep.subr.bf16.mxu0 0
    %626 = vmatpush1.bf16.msra.mxu0 %v614
    %627 = vmatprep.subr.bf16.mxu0 0
    %628 = vmatpush1.bf16.msra.mxu0 %v615
    %629 = vmatprep.subr.bf16.mxu0 0
    %630 = vmatpush1.bf16.msra.mxu0 %v616
    %631 = vmatprep.subr.bf16.mxu0 0
    %632 = vmatpush1.bf16.msra.mxu0 %v617
    %633 = vmatprep.subr.bf16.mxu0 0
    %634 = vmatpush1.bf16.msra.mxu0 %v618
    %635 = vmatprep.subr.bf16.mxu0 0
    %636 = vmatpush1.bf16.msra.mxu0 0
    %637 = vmatprep.subr.bf16.mxu0 0
    %638 = vmatpush1.bf16.msra.mxu0 0
    %639 = vmatprep.subr.bf16.mxu0 0
    %640 = vmatpush1.bf16.msra.mxu0 0
    %641 = vmatprep.subr.bf16.mxu0 0
    %642 = vmatpush1.bf16.msra.mxu0 0
    %643 = vmatprep.subr.bf16.mxu0 0
    %644 = vmatpush1.bf16.msra.mxu0 0
    %645 = vmatprep.subr.bf16.mxu0 0
    %646 = vmatpush1.bf16.msra.mxu0 0
    %647 = vmatprep.subr.bf16.mxu0 0
    %648 = vmatpush1.bf16.msra.mxu0 0
    %649 = vmatprep.subr.bf16.mxu0 0
    %650 = vmatpush1.bf16.msra.mxu0 0
    %651 = vmatprep.mubr.bf16.mxu0 0
    %652 = vmatmul.mubr.bf16.gmra.mrb[0].mxu0 %v610
    %v653 = vpop.f32.mrb[0].mxu0
    %v654 = vadd.f32 0.0, %v653
    %v655 = vpop.f32.mrb[0].mxu0
    %v656 = vpop.f32.mrb[0].mxu0
    %v657 = vpop.f32.mrb[0].mxu0
    %658 = vdwg.mxu0
    %v659 = vld [vmem:[%s4 + $0x3] sm:$0x1]
    %661 = vset.pattern.permute.xlu0 0
    %662 = vperm.xlu0 %661, %v659
    %v663 = vpop.permute.xlu0 %662
    %v665 = vadd.f32 %v654, %v663
    %v666 = vxor.u32 %v665, 2147483648
    %v667 = vmul.f32 %v666, 1.442695
    %v668 = vpow.pop %v667
    %v669 = vadd.f32 %v668, 1.0
    %v670 = vrcp.pop %v669
    %v671 = vmul.f32 1.0, %v670
    %672 = vst [vmem:[#allocation2] sm:$0x1] %v671
    // Predicated region
    $region22: #{tpu_custom_call.1} parent=1 // pred_check
      _
    $region23: #{tpu_custom_call.1} parent=1 // pred_check_branch
      %674 = sbr.rel (0) target = $region25
    $region24: #{tpu_custom_call.1} parent=1 // pred_region
      %s676 = ssub.s32 16, 16
      %677 = vsyncadd [#allocation3], %s676
      %s679 = sshll.u32 [#allocation2], 4
      %s680 = int_to_ptr.vmem [resolvable:$true] %s679
      %682 = dma.vmem_to_hbm [thread:$0]  %s680, 16, %s5, [#allocation3]
    $region25: #{tpu_custom_call.1} parent=1 // pred_fallthru
      _
    // Predicated region
    $region26: #{tpu_custom_call.1} parent=1 // pred_check
      _
    $region27: #{tpu_custom_call.1} parent=1 // pred_check_branch
      %684 = sbr.rel (0) target = $region29
    $region28: #{tpu_custom_call.1} parent=1 // pred_region
      %685 = dma.done [#allocation3], 16
    $region29: #{tpu_custom_call.1} parent=1 // pred_fallthru
      _
    %686 = vsyncpa [#allocation3], 1

</llo_original>
